<compile_context>
chip_gen: v7x
topology: tpu7x:2x2x1
jax: 0.10.0
libtpu: 0.0.40
codegen_flags: <defaults>
</compile_context>

<pallas_src>
import jax
import jax.numpy as jnp
from jax.experimental import pallas as pl
from jax.experimental.pallas import tpu as pltpu


def _softplus(x):
    # Matches F.softplus (threshold=20) for the value ranges seen here.
    return jnp.where(x > 20.0, x, jnp.log1p(jnp.exp(jnp.minimum(x, 20.0))))


def _round_up(n, m):
    return ((n + m - 1) // m) * m


def init_s6_params(key, d_model, state_size):
    """Deterministic synthetic S6 params; Linear weights stored (in, out)."""
    D, N = d_model, state_size
    KP = _round_up(max(D, 16), 16)   # contraction rows: sublane-pad only (bf16 packs 16 rows)
    WCOLS = 128                      # lane-dense slab width: [ M | W1 | v | 0... ]
    assert 2 * KP < WCOLS, "fused slab layout needs 2*KP + 1 <= WCOLS"

    ks = jax.random.split(key, 4)

    def lin(k, din, dout):
        s = 1.0 / jnp.sqrt(jnp.float32(din))
        kw, kb = jax.random.split(k)
        w = jax.random.uniform(kw, (din, dout), jnp.float32, -s, s)
        b = jax.random.uniform(kb, (dout,), jnp.float32, -s, s)
        return w, b

    w1, b1 = lin(ks[0], D, D)   # fc1 -> delta pre-activation
    w2, b2 = lin(ks[1], D, N)   # fc2 -> B
    w3, b3 = lin(ks[2], D, N)   # fc3 -> C
    # A exists in the reference module but never influences the forward output
    # (dA = exp(delta ⊗ A) only multiplies the all-zero hidden state).
    A = jax.random.normal(ks[3], (D, N), jnp.float32) / jnp.sqrt(jnp.float32(N))

    # --- Algebraic fusion of fc2/fc3 (valid because h == 0 every call) ------
    M = w2 @ w3.T               # (D, D)   sum_n W2[:,n] W3[:,n]
    v = w2 @ b3 + w3 @ b2       # (D,)
    c = jnp.dot(b2, b3)         # ()

    # Packed, lane-aligned, zero-padded slab (pad regions are zero BY
    # construction — required so padded lanes contribute nothing).
    #   cols [0:KP)      : M    (x @ M term of B·C)
    #   cols [KP:2KP)    : W1   (delta pre-activation)
    #   col  2*KP        : v    (linear bias term of B·C)
    w_slab = jnp.zeros((KP, WCOLS), jnp.float32)
    w_slab = w_slab.at[:D, 0:D].set(M)
    w_slab = w_slab.at[:D, KP:KP + D].set(w1)
    w_slab = w_slab.at[:D, 2 * KP].set(v)
    w_slab = w_slab.astype(jnp.bfloat16)          # DMA/MXU format (f32 accumulate)

    b_slab = jnp.zeros((1, WCOLS), jnp.float32)   # bias added in f32 after the dot
    b_slab = b_slab.at[0, KP:KP + D].set(b1)
    b_slab = b_slab.at[0, 2 * KP].set(c)

    return dict(w_slab=w_slab, b_slab=b_slab,
                w1=w1, b1=b1, w2=w2, b2=b2, w3=w3, b3=b3, A=A)


def s6_forward(x, w_slab, b_slab):
    """x: (batch, seq_len, d_model) f32 -> (batch, seq_len, d_model) f32.

    NOTE: assumes the module's hidden state h is re-initialized to zero on
    every call (as in the reference forward); the fc2/fc3 fusion and the
    omission of dA rely on that.
    """
    B, L, D = x.shape
    KP, WCOLS = w_slab.shape
    BL = B * L
    BLP = _round_up(max(BL, 8), 8)    # full-sublane row count (18 -> 24)

    # Lane/sublane-padded input slab; padded rows/lanes are exactly zero.
    x_pad = jnp.pad(x.reshape(BL, D), ((0, BLP - BL), (0, KP - D)))

    def s6_kernel(x_ref, w_ref, b_ref, o_ref):
        xx = x_ref[...]                                   # (BLP, KP) f32
        # Single fused MXU matmul: bf16 operands, f32 accumulation.
        z = jnp.dot(xx.astype(jnp.bfloat16), w_ref[...],
                    preferred_element_type=jnp.float32) + b_ref[...]   # (BLP, WCOLS) f32
        xm = z[:, 0:KP]                                   # x @ M
        delta = _softplus(z[:, KP:2 * KP])                # softplus(fc1(x)) (f32 on VPU/EUP)
        # cb = sum_n B_n C_n  =  rowsum((x@M) * x) + x@v + c
        cb = jnp.sum(xm * xx, axis=-1, keepdims=True) + z[:, 2 * KP:2 * KP + 1]
        # Padded lanes/rows of xx are zero, so padded output stays zero.
        o_ref[...] = xx * delta * cb                      # (BLP, KP) f32

    cost = pl.CostEstimate(
        flops=2 * BLP * KP * WCOLS + 6 * BLP * KP,
        transcendentals=2 * BLP * KP,
        bytes_accessed=(x_pad.size * x_pad.dtype.itemsize
                        + w_slab.size * w_slab.dtype.itemsize
                        + b_slab.size * b_slab.dtype.itemsize
                        + BLP * KP * 4),
    )

    y_pad = pl.pallas_call(
        s6_kernel,
        out_shape=jax.ShapeDtypeStruct((BLP, KP), x.dtype),
        in_specs=[pl.BlockSpec(memory_space=pltpu.MemorySpace.VMEM),
                  pl.BlockSpec(memory_space=pltpu.MemorySpace.VMEM),
                  pl.BlockSpec(memory_space=pltpu.MemorySpace.VMEM)],
        out_specs=pl.BlockSpec(memory_space=pltpu.MemorySpace.VMEM),
        cost_estimate=cost,
    )(x_pad, w_slab, b_slab)

    return y_pad[:BL, :D].reshape(B, L, D)


# Pad / matmul / slice all live under one jit so XLA can schedule the
# plumbing around the custom call instead of serializing it.
s6_forward_jit = jax.jit(s6_forward)


def s6_reference(x, p):
    """Pure-JAX mirror of the PyTorch S6.forward (including the zero-h einsums)."""
    Bm = x @ p["w2"] + p["b2"]
    Cm = x @ p["w3"] + p["b3"]
    delta = jax.nn.softplus(x @ p["w1"] + p["b1"])
    dB = jnp.einsum('bld,bln->bldn', delta, Bm)
    h = jnp.zeros(x.shape + (Bm.shape[-1],), x.dtype)
    dA = jnp.exp(jnp.einsum('bld,dn->bldn', delta, p["A"]))
    h = dA * h + x[..., None] * dB
    return jnp.einsum('bln,bldn->bld', Cm, h)


if __name__ == "__main__":
    d_model = 9       # module-level d_model
    seq_len = 9       # module-level seq_len
    state_size = 128  # module-level state_size
    batch = 2         # small batch

    key = jax.random.PRNGKey(0)
    kx, kp = jax.random.split(key)
    x = jax.random.normal(kx, (batch, seq_len, d_model), jnp.float32)
    params = init_s6_params(kp, d_model, state_size)

    y = s6_forward_jit(x, params["w_slab"], params["b_slab"])
    jax.block_until_ready(y)
    assert y.shape == (batch, seq_len, d_model)

    y_ref = s6_reference(x, params)
    # bf16 matmul operands (f32 accumulation): check max error against 1% of
    # the output scale, which is the expected bf16-operand rounding level.
    err = float(jnp.max(jnp.abs(y - y_ref)))
    tol = 1e-2 * (1.0 + float(jnp.max(jnp.abs(y_ref))))
    assert err <= tol, (err, tol)

    print("KERNEL_OK")
</pallas_src>

<mosaic_0001>
module attributes {stable_mosaic.version = 11 : i64} {
  func.func @s6_kernel(%arg0: memref<24x16xf32, #tpu.memory_space<vmem>>, %arg1: memref<16x128xbf16, #tpu.memory_space<vmem>>, %arg2: memref<1x128xf32, #tpu.memory_space<vmem>>, %arg3: memref<24x16xf32, #tpu.memory_space<vmem>>) attributes {dimension_semantics = [], scalar_prefetch = 0 : i64, scratch_operands = 0 : i64, tpu.core_type = #tpu.core_type<tc>} {
    %c0 = arith.constant 0 : index
    %c0_0 = arith.constant 0 : index
    %0 = vector.load %arg0[%c0, %c0_0] : memref<24x16xf32, #tpu.memory_space<vmem>>, vector<24x16xf32>
    %1 = arith.truncf %0 : vector<24x16xf32> to vector<24x16xbf16>
    %c0_1 = arith.constant 0 : index
    %c0_2 = arith.constant 0 : index
    %2 = vector.load %arg1[%c0_1, %c0_2] : memref<16x128xbf16, #tpu.memory_space<vmem>>, vector<16x128xbf16>
    %cst = arith.constant dense<0.000000e+00> : vector<24x128xf32>
    %3 = tpu.matmul %1, %2, %cst {dimension_numbers = #tpu.dot_dimension_numbers<[1], [0], [0], [1], [0, 0, 1, 1], [], []>} : vector<24x16xbf16>, vector<16x128xbf16>, vector<24x128xf32> -> vector<24x128xf32>
    %c0_3 = arith.constant 0 : index
    %c0_4 = arith.constant 0 : index
    %4 = vector.load %arg2[%c0_3, %c0_4] : memref<1x128xf32, #tpu.memory_space<vmem>>, vector<1x128xf32>
    %5 = vector.broadcast %4 : vector<1x128xf32> to vector<24x128xf32>
    %6 = arith.addf %3, %5 : vector<24x128xf32>
    %7 = vector.extract_strided_slice %6 {offsets = [0, 0], sizes = [24, 16], strides = [1, 1]} : vector<24x128xf32> to vector<24x16xf32>
    %8 = vector.extract_strided_slice %6 {offsets = [0, 16], sizes = [24, 16], strides = [1, 1]} : vector<24x128xf32> to vector<24x16xf32>
    %cst_5 = arith.constant 2.000000e+01 : f32
    %9 = vector.broadcast %cst_5 : f32 to vector<24x16xf32>
    %10 = arith.cmpf ogt, %8, %9 : vector<24x16xf32>
    %cst_6 = arith.constant 2.000000e+01 : f32
    %11 = vector.broadcast %cst_6 : f32 to vector<24x16xf32>
    %12 = arith.minimumf %8, %11 : vector<24x16xf32>
    %13 = math.exp %12 : vector<24x16xf32>
    %14 = math.log1p %13 : vector<24x16xf32>
    %15 = arith.select %10, %8, %14 : vector<24x16xi1>, vector<24x16xf32>
    %16 = arith.mulf %7, %0 : vector<24x16xf32>
    %cst_7 = arith.constant dense<0.000000e+00> : vector<24xf32>
    %17 = vector.multi_reduction <add>, %16, %cst_7 [1] : vector<24x16xf32> to vector<24xf32>
    %18 = vector.shape_cast %17 : vector<24xf32> to vector<24x1xf32>
    %19 = vector.extract_strided_slice %6 {offsets = [0, 32], sizes = [24, 1], strides = [1, 1]} : vector<24x128xf32> to vector<24x1xf32>
    %20 = arith.addf %18, %19 : vector<24x1xf32>
    %21 = arith.mulf %0, %15 : vector<24x16xf32>
    %22 = vector.broadcast %20 : vector<24x1xf32> to vector<24x16xf32>
    %23 = arith.mulf %21, %22 : vector<24x16xf32>
    %c0_8 = arith.constant 0 : index
    %c0_9 = arith.constant 0 : index
    %24 = vector.load %arg3[%c0_8, %c0_9] : memref<24x16xf32, #tpu.memory_space<vmem>>, vector<24x16xf32>
    tpu.vector_store %arg3[%c0_8, %c0_9], %23 {strides = array<i32>} : memref<24x16xf32, #tpu.memory_space<vmem>>, vector<24x16xf32>,
    return
  }
}

</mosaic_0001>

<llo_original>
// kernel: s6_forward.1
$region0: #{s6_forward.1}
  #allocation0 [shape = 'u32[]', space=smem, size = 0x4, offset = 0x4, fixed_abs, tag = 'smem constant byte address 0x4 - core index']
  #allocation1 [shape = 'u32[144,128]{1,0:T(1,128)}', space=vmem, size = 0x12000, scoped, tag = 'internal scratch']
  %s0 = inlined_call_operand.vmem [shape: f32[24,16], index: 0, kind: input, shape index: {}]
  %s1 = inlined_call_operand.vmem [shape: bf16[16,128], index: 1, kind: input, shape index: {}]
  %s2 = inlined_call_operand.vmem [shape: f32[1,128], index: 2, kind: input, shape index: {}]
  %s3 = inlined_call_operand.vmem [shape: f32[24,16], index: 3, kind: output, shape index: {}]
  %s4 = sld [smem:[#allocation0]]
  $region22: #{s6_forward.1} parent=0
    _
  %s6 = ssub.s32 1, %s4
  %s7 = scalar_select 0, %s6, %s4
  // Predicated region
  $region2: #{s6_forward.1} parent=0 // pred_check
    _
  $region3: #{s6_forward.1} parent=0 // pred_check_branch
    %9 = sbr.rel (0) target = $region5
  $region4: #{s6_forward.1} parent=0 // pred_region
    _
  $region5: #{s6_forward.1} parent=0 // pred_fallthru
    _
  // Predicated region
  $region6: #{s6_forward.1} parent=0 // pred_check
    _
  $region7: #{s6_forward.1} parent=0 // pred_check_branch
    %11 = sbr.rel (0) target = $region9
  $region8: #{s6_forward.1} parent=0 // pred_region
    _
  $region9: #{s6_forward.1} parent=0 // pred_fallthru
    _
  // Predicated region
  $region10: #{s6_forward.1} parent=0 // pred_check
    _
  $region11: #{s6_forward.1} parent=0 // pred_check_branch
    %13 = sbr.rel (0) target = $region13
  $region12: #{s6_forward.1} parent=0 // pred_region
    _
  $region13: #{s6_forward.1} parent=0 // pred_fallthru
    _
  %v15 = vld [vmem:[%s0] sm:$0xff]
  %v16 = vld [vmem:[%s0 + $0x8] sm:$0xff]
  %v17 = vld [vmem:[%s0 + $0x10] sm:$0xff]
  %v18 = vpack.c.bf16 %v16, %v15
  %v19 = vpack.c.bf16 %v17, %v17
  %v20 = vld [vmem:[%s1] sm:$0xf]
  %v21 = vld [vmem:[%s1 + $0x4] sm:$0xf]
  %v22 = vld [vmem:[%s2] sm:$0x1]
  %v24 = vlaneseq
  %v25 = vshrl.u32 %v24, 7
  %v26 = vsub.s32 0, %v25
  %v27 = vrot.slane %v22, %v26
  %v31 = vunpack.c.l.b16 %v20
  %v32 = vunpack.c.l.b16 %v21
  %v33 = vpack.c.b16 %v32, %v31
  %vm35 = vcmask 130048
  %v37 = vsel %vm35, %v18, 0
  %v40 = vsel %vm35, %v19, 0
  %42 = vmatprep.subr.bf16.mxu0 0
  %43 = vmatpush1.bf16.msra.mxu0 %v33
  %44 = vmatprep.subr.bf16.mxu0 0
  %45 = vmatpush1.bf16.msra.mxu0 0
  %46 = vmatprep.subr.bf16.mxu0 0
  %47 = vmatpush1.bf16.msra.mxu0 0
  %48 = vmatprep.subr.bf16.mxu0 0
  %49 = vmatpush1.bf16.msra.mxu0 0
  %50 = vmatprep.subr.bf16.mxu0 0
  %51 = vmatpush1.bf16.msra.mxu0 0
  %52 = vmatprep.subr.bf16.mxu0 0
  %53 = vmatpush1.bf16.msra.mxu0 0
  %54 = vmatprep.subr.bf16.mxu0 0
  %55 = vmatpush1.bf16.msra.mxu0 0
  %56 = vmatprep.subr.bf16.mxu0 0
  %57 = vmatpush1.bf16.msra.mxu0 0
  %58 = vmatprep.subr.bf16.mxu0 0
  %59 = vmatpush1.bf16.msra.mxu0 0
  %60 = vmatprep.subr.bf16.mxu0 0
  %61 = vmatpush1.bf16.msra.mxu0 0
  %62 = vmatprep.subr.bf16.mxu0 0
  %63 = vmatpush1.bf16.msra.mxu0 0
  %64 = vmatprep.subr.bf16.mxu0 0
  %65 = vmatpush1.bf16.msra.mxu0 0
  %66 = vmatprep.subr.bf16.mxu0 0
  %67 = vmatpush1.bf16.msra.mxu0 0
  %68 = vmatprep.subr.bf16.mxu0 0
  %69 = vmatpush1.bf16.msra.mxu0 0
  %70 = vmatprep.subr.bf16.mxu0 0
  %71 = vmatpush1.bf16.msra.mxu0 0
  %72 = vmatprep.subr.bf16.mxu0 0
  %73 = vmatpush1.bf16.msra.mxu0 0
  %74 = vmatprep.mubr.bf16.mxu0 0
  %75 = vmatmul.mubr.bf16.gmra.mrb[0].mxu0 %v37
  %v76 = vpop.f32.mrb[0].mxu0
  %v77 = vadd.f32 %v27, %v76
  %v78 = vpop.f32.mrb[0].mxu0
  %v79 = vpop.f32.mrb[0].mxu0
  %v80 = vadd.f32 %v27, %v79
  %v81 = vpop.f32.mrb[0].mxu0
  %82 = vmatprep.mubr.bf16.mxu0 0
  %83 = vmatmul.mubr.bf16.gmra.mrb[0].mxu0 %v40
  %v84 = vpop.f32.mrb[0].mxu0
  %v85 = vadd.f32 %v27, %v84
  %v86 = vpop.f32.mrb[0].mxu0
  %v87 = vpop.f32.mrb[0].mxu0
  %v88 = vpop.f32.mrb[0].mxu0
  %89 = vdwg.mxu0
  %vm90 = vcmp.gt.f32.partialorder %v77, 20.0
  %vm91 = vcmp.gt.f32.partialorder %v80, 20.0
  %vm92 = vcmp.gt.f32.partialorder %v85, 20.0
  %v93 = vmin.f32 %v77, 20.0
  %v94 = vmin.f32 %v80, 20.0
  %v95 = vmin.f32 %v85, 20.0
  %v96 = vmul.f32 %v93, 1.442695
  %v97 = vpow.pop %v96
  %v98 = vmul.f32 %v94, 1.442695
  %v99 = vpow.pop %v98
  %v100 = vmul.f32 %v95, 1.442695
  %v101 = vpow.pop %v100
  %v102 = vadd.f32 %v97, 1.0
  %v103 = vlog2.pop %v102
  %v104 = vmul.f32 %v103, 0.6931472
  %v105 = vmul.f32 -0.5, %v97
  %v106 = vadd.f32 %v105, 1.0
  %v107 = vmul.f32 %v106, %v97
  %v108 = vand.u32 2147483647, %v97
  %vm109 = vcmp.lt.f32.partialorder %v108, 0.0004427343
  %v110 = vsel %vm109, %v107, %v104
  %v111 = vadd.f32 %v99, 1.0
  %v112 = vlog2.pop %v111
  %v113 = vmul.f32 %v112, 0.6931472
  %v114 = vmul.f32 -0.5, %v99
  %v115 = vadd.f32 %v114, 1.0
  %v116 = vmul.f32 %v115, %v99
  %v117 = vand.u32 2147483647, %v99
  %vm118 = vcmp.lt.f32.partialorder %v117, 0.0004427343
  %v119 = vsel %vm118, %v116, %v113
  %v120 = vadd.f32 %v101, 1.0
  %v121 = vlog2.pop %v120
  %v122 = vmul.f32 %v121, 0.6931472
  %v123 = vmul.f32 -0.5, %v101
  %v124 = vadd.f32 %v123, 1.0
  %v125 = vmul.f32 %v124, %v101
  %v126 = vand.u32 2147483647, %v101
  %vm127 = vcmp.lt.f32.partialorder %v126, 0.0004427343
  %v128 = vsel %vm127, %v125, %v122
  %v129 = vsel %vm90, %v77, %v110
  %v130 = vsel %vm91, %v80, %v119
  %v131 = vsel %vm92, %v85, %v128
  %v132 = vmul.f32 %v77, %v15
  %v133 = vmul.f32 %v80, %v16
  %v134 = vmul.f32 %v85, %v17
  %v135 = vsel %vm35, %v132, 0.0
  %136 = vadd.xlane.f32.xlu0 %v135
  %v137 = vpop.xlane.xlu0 %136
  %v138 = vsel %vm35, %v133, 0.0
  %139 = vadd.xlane.f32.xlu0 %v138
  %v140 = vpop.xlane.xlu0 %139
  %v141 = vsel %vm35, %v134, 0.0
  %142 = vadd.xlane.f32.xlu0 %v141
  %v143 = vpop.xlane.xlu0 %142
  %v144 = vadd.f32 %v137, %v77
  %v145 = vadd.f32 %v140, %v80
  %v146 = vadd.f32 %v143, %v85
  %150 = vrot.lane.b32.xlu0 %v129, 112
  %v151 = vpop.permute.xlu0 %150
  %152 = vrot.lane.b32.xlu0 %v130, 112
  %v153 = vpop.permute.xlu0 %152
  %154 = vrot.lane.b32.xlu0 %v131, 112
  %v155 = vpop.permute.xlu0 %154
  %v159 = vmul.f32 %v15, %v151
  %v160 = vmul.f32 %v16, %v153
  %v161 = vmul.f32 %v17, %v155
  %163 = vset.pattern.permute.xlu0 32
  %164 = vperm.xlu0 %163, %v144
  %v165 = vpop.permute.xlu0 %164
  %168 = vset.pattern.permute.xlu0 32
  %169 = vperm.xlu0 %168, %v145
  %v170 = vpop.permute.xlu0 %169
  %173 = vset.pattern.permute.xlu0 32
  %174 = vperm.xlu0 %173, %v146
  %v175 = vpop.permute.xlu0 %174
  %v177 = vmul.f32 %v159, %v165
  %v178 = vmul.f32 %v160, %v170
  %v179 = vmul.f32 %v161, %v175
  %180 = vst.msk [vmem:[%s3] sm:$0xff] %vm35, %v177
  %181 = vst.msk [vmem:[%s3 + $0x8] sm:$0xff] %vm35, %v178
  %182 = vst.msk [vmem:[%s3 + $0x10] sm:$0xff] %vm35, %v179
  // Predicated region
  $region14: #{s6_forward.1} parent=0 // pred_check
    _
  $region15: #{s6_forward.1} parent=0 // pred_check_branch
    %184 = sbr.rel (0) target = $region17
  $region16: #{s6_forward.1} parent=0 // pred_region
    _
  $region17: #{s6_forward.1} parent=0 // pred_fallthru
    _
  // Predicated region
  $region18: #{s6_forward.1} parent=0 // pred_check
    _
  $region19: #{s6_forward.1} parent=0 // pred_check_branch
    %186 = sbr.rel (0) target = $region21
  $region20: #{s6_forward.1} parent=0 // pred_region
    _
  $region21: #{s6_forward.1} parent=0 // pred_fallthru
    _

</llo_original>
